<compile_context>
chip_gen: v7x
topology: tpu7x:2x2x1
jax: 0.10.0
libtpu: 0.0.40
codegen_flags: <defaults>
</compile_context>

<pallas_src>
import jax
import jax.numpy as jnp
from jax.experimental import pallas as pl
from jax.experimental.pallas import tpu as pltpu


def _round_up(v: int, m: int) -> int:
    return (v + m - 1) // m * m


def addmm_kernel(bias_ref, x_ref, mat_ref, o_ref):
    # x_ref:   (tm, K)  VMEM tile (re-fetched per inner step; small)
    # mat_ref: (K, tn)  VMEM tile (resident across the inner M loop)
    # bias_ref:(1, tn)  VMEM tile (resident across the inner M loop)
    acc = jnp.dot(x_ref[...], mat_ref[...], preferred_element_type=jnp.float32)
    o_ref[...] = (acc + bias_ref[...].astype(jnp.float32)).astype(o_ref.dtype)


def addmm(bias, x, mat, *, tm=256, tn=256, use_bf16=False):
    """out = bias + x @ mat  (torch.addmm semantics)."""
    M, K = x.shape
    K2, N = mat.shape
    assert K == K2 and bias.shape == (1, N)
    out_dtype = x.dtype

    # Clamp tiles to the (8, 128)-aligned problem size, then pad to tile
    # multiples so any (M, N) is accepted.
    tm = min(tm, _round_up(M, 8))
    tn = min(tn, _round_up(N, 128))
    Mp = _round_up(M, tm)
    Np = _round_up(N, tn)

    xp = x if Mp == M else jnp.pad(x, ((0, Mp - M), (0, 0)))
    matp = mat if Np == N else jnp.pad(mat, ((0, 0), (0, Np - N)))
    biasp = bias if Np == N else jnp.pad(bias, ((0, 0), (0, Np - N)))

    if use_bf16:
        # Halve HBM bytes for the streamed operands; accumulate in f32.
        xp = xp.astype(jnp.bfloat16)
        matp = matp.astype(jnp.bfloat16)

    grid = (Np // tn, Mp // tm)  # N outer, M inner -> weight tile stays resident.

    in_bytes = 2 if use_bf16 else 4
    vmem_need = 2 * ((tm * K + K * tn + tn) * in_bytes + tm * tn * 4)
    vmem_limit = int(min(64 * 1024 * 1024, max(2 * vmem_need, 16 * 1024 * 1024)))

    out_p = pl.pallas_call(
        addmm_kernel,
        out_shape=jax.ShapeDtypeStruct((Mp, Np), out_dtype),
        grid_spec=pltpu.PrefetchScalarGridSpec(
            num_scalar_prefetch=0,
            grid=grid,
            in_specs=[
                pl.BlockSpec((1, tn), lambda j, i: (0, j)),   # bias (outer-only)
                pl.BlockSpec((tm, K), lambda j, i: (i, 0)),   # x    (inner)
                pl.BlockSpec((K, tn), lambda j, i: (0, j)),   # mat  (outer-only)
            ],
            out_specs=pl.BlockSpec((tm, tn), lambda j, i: (i, j)),
        ),
        compiler_params=pltpu.CompilerParams(
            dimension_semantics=("parallel", "parallel"),
            vmem_limit_bytes=vmem_limit,
        ),
    )(biasp, xp, matp)

    if Mp != M or Np != N:
        out_p = out_p[:M, :N]
    return out_p


if __name__ == "__main__":
    key = jax.random.PRNGKey(0)

    # --- Small shape consistent with AddMMModule(in_size, out_size) --------
    M, in_size, out_size = 16, 32, 256
    kx, kmat, kbias, k2 = jax.random.split(key, 4)

    x = jax.random.normal(kx, (M, in_size), dtype=jnp.float32)
    mat = jax.random.normal(kmat, (in_size, out_size), dtype=jnp.float32)
    bias = jax.random.normal(kbias, (1, out_size), dtype=jnp.float32)

    out = addmm(bias, x, mat)
    jax.block_until_ready(out)

    ref = bias + x @ mat
    assert out.shape == (M, out_size)
    assert jnp.allclose(out, ref, atol=1e-3, rtol=1e-3)

    # --- Larger, non-tile-aligned shape: exercises padding, multi-step grid,
    #     and the resident-weight inner loop. ------------------------------
    M2, K2, N2 = 384, 64, 384
    k2x, k2m, k2b = jax.random.split(k2, 3)
    x2 = jax.random.normal(k2x, (M2, K2), dtype=jnp.float32)
    mat2 = jax.random.normal(k2m, (K2, N2), dtype=jnp.float32)
    bias2 = jax.random.normal(k2b, (1, N2), dtype=jnp.float32)

    out2 = addmm(bias2, x2, mat2)
    jax.block_until_ready(out2)

    ref2 = bias2 + x2 @ mat2
    assert out2.shape == (M2, N2)
    assert jnp.allclose(out2, ref2, atol=1e-3, rtol=1e-3)

    print("KERNEL_OK")
</pallas_src>

<mosaic_0001>
module attributes {stable_mosaic.version = 11 : i64} {
  func.func @addmm_kernel(%arg0: i32, %arg1: i32, %arg2: memref<1x256xf32, #tpu.memory_space<vmem>>, %arg3: memref<16x32xf32, #tpu.memory_space<vmem>>, %arg4: memref<32x256xf32, #tpu.memory_space<vmem>>, %arg5: memref<16x256xf32, #tpu.memory_space<vmem>>) attributes {dimension_semantics = [#tpu.dimension_semantics<parallel>, #tpu.dimension_semantics<parallel>], iteration_bounds = array<i64: 1, 1>, scalar_prefetch = 0 : i64, scratch_operands = 0 : i64, tpu.core_type = #tpu.core_type<tc>, window_params = [{transform_indices = @transform_0, window_bounds = array<i64: 1, 256>}, {transform_indices = @transform_1, window_bounds = array<i64: 16, 32>}, {transform_indices = @transform_2, window_bounds = array<i64: 32, 256>}, {transform_indices = @transform_3, window_bounds = array<i64: 16, 256>}]} {
    %c0 = arith.constant 0 : index
    %c0_0 = arith.constant 0 : index
    %0 = vector.load %arg3[%c0, %c0_0] : memref<16x32xf32, #tpu.memory_space<vmem>>, vector<16x32xf32>
    %c0_1 = arith.constant 0 : index
    %c0_2 = arith.constant 0 : index
    %1 = vector.load %arg4[%c0_1, %c0_2] : memref<32x256xf32, #tpu.memory_space<vmem>>, vector<32x256xf32>
    %cst = arith.constant dense<0.000000e+00> : vector<16x256xf32>
    %2 = tpu.matmul %0, %1, %cst {dimension_numbers = #tpu.dot_dimension_numbers<[1], [0], [0], [1], [0, 0, 1, 1], [], []>} : vector<16x32xf32>, vector<32x256xf32>, vector<16x256xf32> -> vector<16x256xf32>
    %c0_3 = arith.constant 0 : index
    %c0_4 = arith.constant 0 : index
    %3 = vector.load %arg2[%c0_3, %c0_4] : memref<1x256xf32, #tpu.memory_space<vmem>>, vector<1x256xf32>
    %4 = vector.broadcast %3 : vector<1x256xf32> to vector<16x256xf32>
    %5 = arith.addf %2, %4 : vector<16x256xf32>
    %c0_5 = arith.constant 0 : index
    %c0_6 = arith.constant 0 : index
    %6 = vector.load %arg5[%c0_5, %c0_6] : memref<16x256xf32, #tpu.memory_space<vmem>>, vector<16x256xf32>
    tpu.vector_store %arg5[%c0_5, %c0_6], %5 {strides = array<i32>} : memref<16x256xf32, #tpu.memory_space<vmem>>, vector<16x256xf32>,
    return
  }
  func.func @transform_0(%arg0: i32, %arg1: i32) -> (i32, i32) {
    %c0_i32 = arith.constant 0 : i32
    %c0_i32_0 = arith.constant 0 : i32
    return %c0_i32, %arg0 : i32, i32
  }
  func.func @transform_1(%arg0: i32, %arg1: i32) -> (i32, i32) {
    %c0_i32 = arith.constant 0 : i32
    %c0_i32_0 = arith.constant 0 : i32
    return %arg1, %c0_i32 : i32, i32
  }
  func.func @transform_2(%arg0: i32, %arg1: i32) -> (i32, i32) {
    %c0_i32 = arith.constant 0 : i32
    %c0_i32_0 = arith.constant 0 : i32
    return %c0_i32, %arg0 : i32, i32
  }
  func.func @transform_3(%arg0: i32, %arg1: i32) -> (i32, i32) {
    %c0_i32 = arith.constant 0 : i32
    return %arg1, %arg0 : i32, i32
  }
}

</mosaic_0001>

<llo_original>
// kernel: tpu_custom_call.1
$region0: #{tpu_custom_call.1}
  #allocation0 [shape = 'u32[]', space=smem, size = 0x4, offset = 0x4, fixed_abs, tag = 'smem constant byte address 0x4 - core index']
  #allocation1 [shape = 'u32[144,128]{1,0:T(1,128)}', space=vmem, size = 0x12000, scoped, tag = 'internal scratch']
  %s0 = inlined_call_operand.hbm [shape: f32[1,256], index: 0, kind: input, shape index: {}]
  %s1 = inlined_call_operand.hbm [shape: f32[16,32], index: 1, kind: input, shape index: {}]
  %s2 = inlined_call_operand.hbm [shape: f32[32,256], index: 2, kind: input, shape index: {}]
  %s3 = inlined_call_operand.hbm [shape: f32[16,256], index: 3, kind: output, shape index: {}]
  %s4 = sld [smem:[#allocation0]]
  $region34: #{tpu_custom_call.1} parent=0
    _
  %s6 = ssub.s32 1, %s4
  %s7 = scalar_select 0, %s6, %s4
  $region1: #{tpu_custom_call.1} parent=0
    #allocation2 [shape = 'u8[1024]{0}', space=vmem, size = 0x400, scoped, tag = 'input window, operand 0, single buffered']
    #allocation3 [shape = 's32[1]{0}', space=sflag, size = 0x4, scoped, tag = 'scoped memory for tpu_custom_call.1']
    #allocation4 [shape = 's32[1]{0}', space=sflag, size = 0x4, scoped, tag = 'scoped memory for tpu_custom_call.1']
    #allocation5 [shape = 'u8[8192]{0}', space=vmem, size = 0x2000, scoped, tag = 'input window, operand 1, single buffered']
    #allocation6 [shape = 's32[1]{0}', space=sflag, size = 0x4, scoped, tag = 'scoped memory for tpu_custom_call.1']
    #allocation7 [shape = 'u8[32768]{0}', space=vmem, size = 0x8000, scoped, tag = 'input window, operand 2, single buffered']
    #allocation8 [shape = 'u8[16384]{0}', space=vmem, size = 0x4000, scoped, tag = 'output window, operand 0, single buffered']
    %8 = vsyncpa [#allocation3], 0
    %9 = vsyncpa [#allocation6], 0
    %10 = vsyncpa [#allocation4], 0
    // Predicated region
    $region2: #{tpu_custom_call.1} parent=1 // pred_check
      _
    $region3: #{tpu_custom_call.1} parent=1 // pred_check_branch
      %12 = sbr.rel (0) target = $region5
    $region4: #{tpu_custom_call.1} parent=1 // pred_region
      %s14 = ssub.s32 32, 32
      %15 = vsyncadd [#allocation3], %s14
      %s17 = sshll.u32 [#allocation2], 4
      %s18 = int_to_ptr.vmem [resolvable:$true] %s17
      %20 = dma.hbm_to_vmem [thread:$0]  %s0, 32, %s18, [#allocation3]
    $region5: #{tpu_custom_call.1} parent=1 // pred_fallthru
      _
    // Predicated region
    $region6: #{tpu_custom_call.1} parent=1 // pred_check
      _
    $region7: #{tpu_custom_call.1} parent=1 // pred_check_branch
      %22 = sbr.rel (0) target = $region9
    $region8: #{tpu_custom_call.1} parent=1 // pred_region
      %s24 = ssub.s32 256, 256
      %25 = vsyncadd [#allocation6], %s24
      %s26 = sshll.u32 [#allocation5], 4
      %s27 = int_to_ptr.vmem [resolvable:$true] %s26
      %32 = dma.hbm_to_vmem [thread:$0]  %s1, 256, %s27, [#allocation6], 128, 128, 8
    $region9: #{tpu_custom_call.1} parent=1 // pred_fallthru
      _
    // Predicated region
    $region10: #{tpu_custom_call.1} parent=1 // pred_check
      _
    $region11: #{tpu_custom_call.1} parent=1 // pred_check_branch
      %34 = sbr.rel (0) target = $region13
    $region12: #{tpu_custom_call.1} parent=1 // pred_region
      %s36 = ssub.s32 1024, 1024
      %37 = vsyncadd [#allocation6], %s36
      %s38 = sshll.u32 [#allocation7], 4
      %s39 = int_to_ptr.vmem [resolvable:$true] %s38
      %44 = dma.hbm_to_vmem [thread:$0]  %s2, 1024, %s39, [#allocation6], 256, 256, 16
    $region13: #{tpu_custom_call.1} parent=1 // pred_fallthru
      _
    // Predicated region
    $region14: #{tpu_custom_call.1} parent=1 // pred_check
      _
    $region15: #{tpu_custom_call.1} parent=1 // pred_check_branch
      %46 = sbr.rel (0) target = $region17
    $region16: #{tpu_custom_call.1} parent=1 // pred_region
      %47 = dma.done [#allocation3], 32
    $region17: #{tpu_custom_call.1} parent=1 // pred_fallthru
      _
    // Predicated region
    $region18: #{tpu_custom_call.1} parent=1 // pred_check
      _
    $region19: #{tpu_custom_call.1} parent=1 // pred_check_branch
      %49 = sbr.rel (0) target = $region21
    $region20: #{tpu_custom_call.1} parent=1 // pred_region
      %50 = dma.done [#allocation6], 256
    $region21: #{tpu_custom_call.1} parent=1 // pred_fallthru
      _
    // Predicated region
    $region22: #{tpu_custom_call.1} parent=1 // pred_check
      _
    $region23: #{tpu_custom_call.1} parent=1 // pred_check_branch
      %52 = sbr.rel (0) target = $region25
    $region24: #{tpu_custom_call.1} parent=1 // pred_region
      %53 = dma.done [#allocation6], 1024
    $region25: #{tpu_custom_call.1} parent=1 // pred_fallthru
      _
    %v54 = vld [vmem:[#allocation5] sm:$0xff]
    %v55 = vld [vmem:[#allocation5 + $0x8] sm:$0xff]
    %v56 = vld [vmem:[#allocation7] sm:$0xff]
    %v57 = vld [vmem:[#allocation7 + $0x8] sm:$0xff]
    %v58 = vld [vmem:[#allocation7 + $0x10] sm:$0xff]
    %v59 = vld [vmem:[#allocation7 + $0x18] sm:$0xff]
    %v60 = vld [vmem:[#allocation7 + $0x20] sm:$0xff]
    %v61 = vld [vmem:[#allocation7 + $0x28] sm:$0xff]
    %v62 = vld [vmem:[#allocation7 + $0x30] sm:$0xff]
    %v63 = vld [vmem:[#allocation7 + $0x38] sm:$0xff]
    %v64 = vld [vmem:[#allocation2] sm:$0x3]
    %v66 = vlaneseq
    %v67 = vshrl.u32 %v66, 7
    %v68 = vsub.s32 0, %v67
    %v69 = vrot.slane %v64, %v68
    %v70 = vlaneseq
    %v71 = vshrl.u32 %v70, 7
    %v72 = vsub.s32 1, %v71
    %v73 = vrot.slane %v64, %v72
    %vm76 = vcmask 261120
    %v78 = vsel %vm76, %v54, 0
    %v81 = vsel %vm76, %v55, 0
    %83 = vmatprep.subr.mxu0 %v57
    %84 = vmatpush1.msra.mxu0 %v56
    %85 = vmatprep.subr.mxu0 %v59
    %86 = vmatpush1.msra.mxu0 %v58
    %87 = vmatprep.subr.mxu0 %v61
    %88 = vmatpush1.msra.mxu0 %v60
    %89 = vmatprep.subr.mxu0 %v63
    %90 = vmatpush1.msra.mxu0 %v62
    %91 = vmatprep.subr.mxu0 0.0
    %92 = vmatpush1.msra.mxu0 0.0
    %93 = vmatprep.subr.mxu0 0.0
    %94 = vmatpush1.msra.mxu0 0.0
    %95 = vmatprep.subr.mxu0 0.0
    %96 = vmatpush1.msra.mxu0 0.0
    %97 = vmatprep.subr.mxu0 0.0
    %98 = vmatpush1.msra.mxu0 0.0
    %99 = vmatprep.subr.mxu0 0.0
    %100 = vmatpush1.msra.mxu0 0.0
    %101 = vmatprep.subr.mxu0 0.0
    %102 = vmatpush1.msra.mxu0 0.0
    %103 = vmatprep.subr.mxu0 0.0
    %104 = vmatpush1.msra.mxu0 0.0
    %105 = vmatprep.subr.mxu0 0.0
    %106 = vmatpush1.msra.mxu0 0.0
    %107 = vmatprep.subr.mxu0 0.0
    %108 = vmatpush1.msra.mxu0 0.0
    %109 = vmatprep.subr.mxu0 0.0
    %110 = vmatpush1.msra.mxu0 0.0
    %111 = vmatprep.subr.mxu0 0.0
    %112 = vmatpush1.msra.mxu0 0.0
    %113 = vmatprep.subr.mxu0 0.0
    %114 = vmatpush1.msra.mxu0 0.0
    %115 = vmatprep.subr.mxu0 0.0
    %116 = vmatpush1.msra.mxu0 0.0
    %117 = vmatprep.subr.mxu0 0.0
    %118 = vmatpush1.msra.mxu0 0.0
    %119 = vmatprep.subr.mxu0 0.0
    %120 = vmatpush1.msra.mxu0 0.0
    %121 = vmatprep.subr.mxu0 0.0
    %122 = vmatpush1.msra.mxu0 0.0
    %123 = vmatprep.subr.mxu0 0.0
    %124 = vmatpush1.msra.mxu0 0.0
    %125 = vmatprep.subr.mxu0 0.0
    %126 = vmatpush1.msra.mxu0 0.0
    %127 = vmatprep.subr.mxu0 0.0
    %128 = vmatpush1.msra.mxu0 0.0
    %129 = vmatprep.subr.mxu0 0.0
    %130 = vmatpush1.msra.mxu0 0.0
    %131 = vmatprep.subr.mxu0 0.0
    %132 = vmatpush1.msra.mxu0 0.0
    %133 = vmatprep.subr.mxu0 0.0
    %134 = vmatpush1.msra.mxu0 0.0
    %135 = vmatprep.subr.mxu0 0.0
    %136 = vmatpush1.msra.mxu0 0.0
    %137 = vmatprep.subr.mxu0 0.0
    %138 = vmatpush1.msra.mxu0 0.0
    %139 = vmatprep.subr.mxu0 0.0
    %140 = vmatpush1.msra.mxu0 0.0
    %141 = vmatprep.subr.mxu0 0.0
    %142 = vmatpush1.msra.mxu0 0.0
    %143 = vmatprep.subr.mxu0 0.0
    %144 = vmatpush1.msra.mxu0 0.0
    %145 = vmatprep.subr.mxu0 0.0
    %146 = vmatpush1.msra.mxu0 0.0
    %147 = vmatprep.mubr.f32.mxu0 0.0
    %148 = vmatmul.mubr.f32.gmra.mrb[0].mxu0 %v78
    %v149 = vpop.f32.mrb[0].mxu0
    %v150 = vadd.f32 %v69, %v149
    %v151 = vpop.f32.mrb[0].mxu0
    %v152 = vadd.f32 %v73, %v151
    %153 = vmatprep.mubr.f32.mxu0 0.0
    %154 = vmatmul.mubr.f32.gmra.mrb[0].mxu0 %v81
    %v155 = vpop.f32.mrb[0].mxu0
    %v156 = vadd.f32 %v69, %v155
    %v157 = vpop.f32.mrb[0].mxu0
    %v158 = vadd.f32 %v73, %v157
    %159 = vdwg.mxu0
    %160 = vst [vmem:[#allocation8] sm:$0xff] %v150
    %161 = vst [vmem:[#allocation8 + $0x8] sm:$0xff] %v152
    %162 = vst [vmem:[#allocation8 + $0x10] sm:$0xff] %v156
    %163 = vst [vmem:[#allocation8 + $0x18] sm:$0xff] %v158
    // Predicated region
    $region26: #{tpu_custom_call.1} parent=1 // pred_check
      _
    $region27: #{tpu_custom_call.1} parent=1 // pred_check_branch
      %165 = sbr.rel (0) target = $region29
    $region28: #{tpu_custom_call.1} parent=1 // pred_region
      %s167 = ssub.s32 512, 512
      %168 = vsyncadd [#allocation4], %s167
      %s169 = sshll.u32 [#allocation8], 4
      %s170 = int_to_ptr.vmem [resolvable:$true] %s169
      %175 = dma.vmem_to_hbm [thread:$0]  %s170, 512, %s3, [#allocation4], 256, 256, 16
    $region29: #{tpu_custom_call.1} parent=1 // pred_fallthru
      _
    // Predicated region
    $region30: #{tpu_custom_call.1} parent=1 // pred_check
      _
    $region31: #{tpu_custom_call.1} parent=1 // pred_check_branch
      %177 = sbr.rel (0) target = $region33
    $region32: #{tpu_custom_call.1} parent=1 // pred_region
      %178 = dma.done [#allocation4], 512
    $region33: #{tpu_custom_call.1} parent=1 // pred_fallthru
      _
    %179 = vsyncpa [#allocation3], 1
    %180 = vsyncpa [#allocation6], 1
    %181 = vsyncpa [#allocation4], 1

</llo_original>
